<compile_context>
chip_gen: v7x
topology: tpu7x:2x2x1
jax: 0.10.0
libtpu: 0.0.40
codegen_flags: <defaults>
</compile_context>

<pallas_src>
import jax
import jax.numpy as jnp
from jax.experimental import pallas as pl
from jax.experimental.pallas import tpu as pltpu


def _linear_kernel(x_ref, w_ref, b_ref, o_ref):
    """(TN, K) x (K, M) + (1, M) -> (TN, M), K=4, M=3, f32 accumulation."""
    x = x_ref[...].astype(jnp.float32)          # (TN, K)  lanes 0..K-1 live
    w = w_ref[...].astype(jnp.float32)          # (K, M)
    b = b_ref[...].astype(jnp.float32)          # (1, M)
    k = w.shape[0]                              # static (=4): unrolls at trace time

    # K=4 unrolled broadcast-FMA on the VPU (no MXU K/N padding / f32 multi-pass).
    acc = x[:, 0:1] * w[0:1, :]                 # (TN,1)*(1,M) -> (TN,M)
    for kk in range(1, k):
        acc = acc + x[:, kk:kk + 1] * w[kk:kk + 1, :]
    o_ref[...] = (acc + b).astype(o_ref.dtype)


def _round_up(a, b):
    return ((a + b - 1) // b) * b


def smclass_forward(x, weight, bias, *, block_n=8192, single_block_n=1024):
    """x: (N, 4); weight: (3, 4) (PyTorch layout); bias: (3,). Returns (N, 3)."""
    n, k = x.shape
    m = weight.shape[0]
    w_t = weight.T                   # (K, M): output features on the lane axis
    b2 = bias.reshape(1, m)          # (1, M)
    itemsize = jnp.dtype(x.dtype).itemsize
    cost = pl.CostEstimate(
        flops=2 * n * k * m,
        transcendentals=0,
        bytes_accessed=n * (k + m) * itemsize + k * m * 4 + m * 4,
    )

    if n <= single_block_n:
        # Latency-bound regime: whole problem is one VMEM block.  No grid, no
        # index_map plumbing, just a cost estimate so XLA schedules around the
        # custom call sensibly.
        return pl.pallas_call(
            _linear_kernel,
            out_shape=jax.ShapeDtypeStruct((n, m), x.dtype),
            cost_estimate=cost,
        )(x, w_t, b2)

    # Memory-bound streaming regime: tile the batch axis, double-buffered by
    # the BlockSpec pipeline; weight/bias stay resident across all steps.
    # Cap the block so grid_n >= 2 (both v7x TensorCores get work); keep it a
    # multiple of 8 to satisfy the (8,128) BlockSpec rule on the sublane dim.
    bn = min(block_n, _round_up(pl.cdiv(n, 2), 8))
    grid_n = pl.cdiv(n, bn)          # no pad: ragged last block handled by Pallas

    return pl.pallas_call(
        _linear_kernel,
        out_shape=jax.ShapeDtypeStruct((n, m), x.dtype),
        grid=(grid_n,),
        in_specs=[
            pl.BlockSpec((bn, k), lambda i: (i, 0)),   # streamed x tiles
            pl.BlockSpec((k, m), lambda i: (0, 0)),    # resident weights
            pl.BlockSpec((1, m), lambda i: (0, 0)),    # resident bias
        ],
        out_specs=pl.BlockSpec((bn, m), lambda i: (i, 0)),
        compiler_params=pltpu.CompilerParams(
            # Batch rows are independent -> shard grid across the two TCs on
            # v7x; harmless on single-TC v5e/v6e.
            dimension_semantics=("parallel",),
            # ~16 MiB of double-buffered in/out blocks at bn=8192; 32 MiB
            # leaves headroom and fits every generation's VMEM.
            vmem_limit_bytes=32 * 1024 * 1024,
        ),
        cost_estimate=cost,
    )(x, w_t, b2)


if __name__ == "__main__":
    key = jax.random.PRNGKey(0)
    k_w, k_b, k_x, k_x2 = jax.random.split(key, 4)

    in_features, out_features = 4, 3

    # Deterministic parameter init (mimics nn.Linear uniform bound 1/sqrt(fan_in)).
    bound = 1.0 / jnp.sqrt(jnp.float32(in_features))
    weight = jax.random.uniform(
        k_w, (out_features, in_features), jnp.float32, -bound, bound
    )
    bias = jax.random.uniform(k_b, (out_features,), jnp.float32, -bound, bound)

    # --- Small-batch path (single block, no grid) ---
    batch = 8
    x = jax.random.normal(k_x, (batch, in_features), jnp.float32)
    y = smclass_forward(x, weight, bias)
    jax.block_until_ready(y)
    y_ref = x @ weight.T + bias
    assert y.shape == (batch, out_features)
    assert jnp.allclose(y, y_ref, atol=1e-5, rtol=1e-5)

    # --- Batch-tiled path: no pad/slice, ragged last block, grid_n >= 2 ---
    big_batch = 3000  # bn = 1504 -> 2 grid steps, last block partially OOB (masked)
    x_big = jax.random.normal(k_x2, (big_batch, in_features), jnp.float32)
    y_big = smclass_forward(x_big, weight, bias)
    jax.block_until_ready(y_big)
    y_big_ref = x_big @ weight.T + bias
    assert y_big.shape == (big_batch, out_features)
    assert jnp.allclose(y_big, y_big_ref, atol=1e-5, rtol=1e-5)

    print("KERNEL_OK")
</pallas_src>

<mosaic_0001>
module attributes {stable_mosaic.version = 11 : i64} {
  func.func @_linear_kernel(%arg0: memref<8x4xf32, #tpu.memory_space<vmem>>, %arg1: memref<4x3xf32, #tpu.memory_space<vmem>>, %arg2: memref<1x3xf32, #tpu.memory_space<vmem>>, %arg3: memref<8x3xf32, #tpu.memory_space<vmem>>) attributes {dimension_semantics = [], scalar_prefetch = 0 : i64, scratch_operands = 0 : i64, tpu.core_type = #tpu.core_type<tc>} {
    %c0 = arith.constant 0 : index
    %c0_0 = arith.constant 0 : index
    %0 = vector.load %arg0[%c0, %c0_0] : memref<8x4xf32, #tpu.memory_space<vmem>>, vector<8x4xf32>
    %c0_1 = arith.constant 0 : index
    %c0_2 = arith.constant 0 : index
    %1 = vector.load %arg1[%c0_1, %c0_2] : memref<4x3xf32, #tpu.memory_space<vmem>>, vector<4x3xf32>
    %c0_3 = arith.constant 0 : index
    %c0_4 = arith.constant 0 : index
    %2 = vector.load %arg2[%c0_3, %c0_4] : memref<1x3xf32, #tpu.memory_space<vmem>>, vector<1x3xf32>
    %3 = vector.extract_strided_slice %0 {offsets = [0, 0], sizes = [8, 1], strides = [1, 1]} : vector<8x4xf32> to vector<8x1xf32>
    %4 = vector.extract_strided_slice %1 {offsets = [0, 0], sizes = [1, 3], strides = [1, 1]} : vector<4x3xf32> to vector<1x3xf32>
    %5 = vector.broadcast %3 : vector<8x1xf32> to vector<8x3xf32>
    %6 = vector.broadcast %4 : vector<1x3xf32> to vector<8x3xf32>
    %7 = arith.mulf %5, %6 : vector<8x3xf32>
    %8 = vector.extract_strided_slice %0 {offsets = [0, 1], sizes = [8, 1], strides = [1, 1]} : vector<8x4xf32> to vector<8x1xf32>
    %9 = vector.extract_strided_slice %1 {offsets = [1, 0], sizes = [1, 3], strides = [1, 1]} : vector<4x3xf32> to vector<1x3xf32>
    %10 = vector.broadcast %8 : vector<8x1xf32> to vector<8x3xf32>
    %11 = vector.broadcast %9 : vector<1x3xf32> to vector<8x3xf32>
    %12 = arith.mulf %10, %11 : vector<8x3xf32>
    %13 = arith.addf %7, %12 : vector<8x3xf32>
    %14 = vector.extract_strided_slice %0 {offsets = [0, 2], sizes = [8, 1], strides = [1, 1]} : vector<8x4xf32> to vector<8x1xf32>
    %15 = vector.extract_strided_slice %1 {offsets = [2, 0], sizes = [1, 3], strides = [1, 1]} : vector<4x3xf32> to vector<1x3xf32>
    %16 = vector.broadcast %14 : vector<8x1xf32> to vector<8x3xf32>
    %17 = vector.broadcast %15 : vector<1x3xf32> to vector<8x3xf32>
    %18 = arith.mulf %16, %17 : vector<8x3xf32>
    %19 = arith.addf %13, %18 : vector<8x3xf32>
    %20 = vector.extract_strided_slice %0 {offsets = [0, 3], sizes = [8, 1], strides = [1, 1]} : vector<8x4xf32> to vector<8x1xf32>
    %21 = vector.extract_strided_slice %1 {offsets = [3, 0], sizes = [1, 3], strides = [1, 1]} : vector<4x3xf32> to vector<1x3xf32>
    %22 = vector.broadcast %20 : vector<8x1xf32> to vector<8x3xf32>
    %23 = vector.broadcast %21 : vector<1x3xf32> to vector<8x3xf32>
    %24 = arith.mulf %22, %23 : vector<8x3xf32>
    %25 = arith.addf %19, %24 : vector<8x3xf32>
    %26 = vector.broadcast %2 : vector<1x3xf32> to vector<8x3xf32>
    %27 = arith.addf %25, %26 : vector<8x3xf32>
    %c0_5 = arith.constant 0 : index
    %c0_6 = arith.constant 0 : index
    %28 = vector.load %arg3[%c0_5, %c0_6] : memref<8x3xf32, #tpu.memory_space<vmem>>, vector<8x3xf32>
    tpu.vector_store %arg3[%c0_5, %c0_6], %27 {strides = array<i32>} : memref<8x3xf32, #tpu.memory_space<vmem>>, vector<8x3xf32>,
    return
  }
}

</mosaic_0001>

<llo_original>
// kernel: tpu_custom_call.1
$region0: #{tpu_custom_call.1}
  #allocation0 [shape = 'u32[]', space=smem, size = 0x4, offset = 0x4, fixed_abs, tag = 'smem constant byte address 0x4 - core index']
  #allocation1 [shape = 'u32[144,128]{1,0:T(1,128)}', space=vmem, size = 0x12000, scoped, tag = 'internal scratch']
  %s0 = inlined_call_operand.vmem [shape: f32[8,4], index: 0, kind: input, shape index: {}]
  %s1 = inlined_call_operand.vmem [shape: f32[4,3], index: 1, kind: input, shape index: {}]
  %s2 = inlined_call_operand.vmem [shape: f32[1,3], index: 2, kind: input, shape index: {}]
  %s3 = inlined_call_operand.vmem [shape: f32[8,3], index: 3, kind: output, shape index: {}]
  %s4 = sld [smem:[#allocation0]]
  $region22: #{tpu_custom_call.1} parent=0
    _
  %s6 = ssub.s32 1, %s4
  %s7 = scalar_select 0, %s6, %s4
  // Predicated region
  $region2: #{tpu_custom_call.1} parent=0 // pred_check
    _
  $region3: #{tpu_custom_call.1} parent=0 // pred_check_branch
    %9 = sbr.rel (0) target = $region5
  $region4: #{tpu_custom_call.1} parent=0 // pred_region
    _
  $region5: #{tpu_custom_call.1} parent=0 // pred_fallthru
    _
  // Predicated region
  $region6: #{tpu_custom_call.1} parent=0 // pred_check
    _
  $region7: #{tpu_custom_call.1} parent=0 // pred_check_branch
    %11 = sbr.rel (0) target = $region9
  $region8: #{tpu_custom_call.1} parent=0 // pred_region
    _
  $region9: #{tpu_custom_call.1} parent=0 // pred_fallthru
    _
  // Predicated region
  $region10: #{tpu_custom_call.1} parent=0 // pred_check
    _
  $region11: #{tpu_custom_call.1} parent=0 // pred_check_branch
    %13 = sbr.rel (0) target = $region13
  $region12: #{tpu_custom_call.1} parent=0 // pred_region
    _
  $region13: #{tpu_custom_call.1} parent=0 // pred_fallthru
    _
  %v14 = vld [vmem:[%s0] sm:$0xff]
  %v15 = vld [vmem:[%s1] sm:$0xf]
  %v16 = vld [vmem:[%s2] sm:$0x1]
  %18 = vset.pattern.permute.xlu0 0
  %19 = vperm.xlu0 %18, %v14
  %v20 = vpop.permute.xlu0 %19
  %v22 = vlaneseq
  %v23 = vshrl.u32 %v22, 7
  %v24 = vsub.s32 0, %v23
  %v25 = vrot.slane %v15, %v24
  %v26 = vmul.f32 %v20, %v25
  %27 = vset.pattern.permute.xlu0 1
  %28 = vperm.xlu0 %27, %v14
  %v29 = vpop.permute.xlu0 %28
  %v31 = vlaneseq
  %v32 = vshrl.u32 %v31, 7
  %v33 = vsub.s32 1, %v32
  %v34 = vrot.slane %v15, %v33
  %v35 = vmul.f32 %v29, %v34
  %v36 = vadd.f32 %v26, %v35
  %37 = vset.pattern.permute.xlu0 2
  %38 = vperm.xlu0 %37, %v14
  %v39 = vpop.permute.xlu0 %38
  %v41 = vlaneseq
  %v42 = vshrl.u32 %v41, 7
  %v43 = vsub.s32 2, %v42
  %v44 = vrot.slane %v15, %v43
  %v45 = vmul.f32 %v39, %v44
  %v46 = vadd.f32 %v36, %v45
  %47 = vset.pattern.permute.xlu0 3
  %48 = vperm.xlu0 %47, %v14
  %v49 = vpop.permute.xlu0 %48
  %v51 = vlaneseq
  %v52 = vshrl.u32 %v51, 7
  %v53 = vsub.s32 3, %v52
  %v54 = vrot.slane %v15, %v53
  %v55 = vmul.f32 %v49, %v54
  %v56 = vadd.f32 %v46, %v55
  %v58 = vlaneseq
  %v59 = vshrl.u32 %v58, 7
  %v60 = vsub.s32 0, %v59
  %v61 = vrot.slane %v16, %v60
  %v63 = vadd.f32 %v56, %v61
  %vm64 = vcmask 23552
  %65 = vst.msk [vmem:[%s3] sm:$0xff] %vm64, %v63
  // Predicated region
  $region14: #{tpu_custom_call.1} parent=0 // pred_check
    _
  $region15: #{tpu_custom_call.1} parent=0 // pred_check_branch
    %67 = sbr.rel (0) target = $region17
  $region16: #{tpu_custom_call.1} parent=0 // pred_region
    _
  $region17: #{tpu_custom_call.1} parent=0 // pred_fallthru
    _
  // Predicated region
  $region18: #{tpu_custom_call.1} parent=0 // pred_check
    _
  $region19: #{tpu_custom_call.1} parent=0 // pred_check_branch
    %69 = sbr.rel (0) target = $region21
  $region20: #{tpu_custom_call.1} parent=0 // pred_region
    _
  $region21: #{tpu_custom_call.1} parent=0 // pred_fallthru
    _

</llo_original>
